<compile_context>
chip_gen: v7x
topology: tpu7x:2x2x1
jax: 0.10.0
libtpu: 0.0.40
codegen_flags: <defaults>
</compile_context>

<pallas_src>
import functools

import jax
import jax.numpy as jnp
from jax.experimental import pallas as pl
from jax.experimental.pallas import tpu as pltpu


def _round_up(x: int, m: int) -> int:
    return -(-x // m) * m


def _vmem_capacity_bytes() -> int:
    """Per-core VMEM capacity; conservative 64 MiB (v7x) if unknown."""
    try:
        cap = getattr(pltpu.get_tpu_info(), "vmem_capacity_bytes", None)
        if cap:
            return int(cap)
    except Exception:
        pass
    return 64 * 1024 * 1024


def _per_row_focal(logits_ref, targets_ref, *, alpha, gamma):
    """Per-row focal loss for the current block -> (tile_b, 1) float32."""
    logits = logits_ref[...].astype(jnp.float32)           # (TB, C)
    tgt = targets_ref[...]                                  # (TB, 1) int32

    # Numerically stable log-sum-exp (per-row max; shifted <= 0, exp <= 1).
    m = jnp.max(logits, axis=-1, keepdims=True)
    sum_e = jnp.sum(jnp.exp(logits - m), axis=-1, keepdims=True)
    lse = m + jnp.log(sum_e)                                # (TB, 1)

    # Gather the target logit from the *unshifted* logits via a one-hot select
    # (fewer live full-tile temporaries; safe for -inf non-target logits).
    col = jax.lax.broadcasted_iota(jnp.int32, logits.shape, 1)
    tgt_logit = jnp.sum(jnp.where(col == tgt, logits, 0.0),
                        axis=-1, keepdims=True)             # (TB, 1)

    ce = lse - tgt_logit                                    # (TB, 1)

    # Focal modulation.
    pt = jnp.exp(-ce)
    om = jnp.maximum(1.0 - pt, 0.0)     # clamp: pt can round slightly above 1
    g = float(gamma)
    if g == 2.0:
        mod = om * om                    # pure-VPU squaring, no EUP pow
    elif g == 1.0:
        mod = om
    elif g == 0.0:
        mod = jnp.ones_like(om)
    else:
        mod = om ** g
    return alpha * mod * ce


def _focal_sum_kernel(logits_ref, targets_ref, partial_ref, *,
                      alpha, gamma, n_valid, tile_b):
    i = pl.program_id(0)
    focal = _per_row_focal(logits_ref, targets_ref, alpha=alpha, gamma=gamma)
    # Mask undefined rows of the ragged trailing block.  Must stay a *select*
    # (not a multiply) so NaN/Inf in the garbage tail cannot propagate.
    row = i * tile_b + jax.lax.broadcasted_iota(jnp.int32, (tile_b, 1), 0)
    focal = jnp.where(row < n_valid, focal, 0.0)
    # Lane-dense (8, 128) per-tile output block, filled with the tile sum.
    partial_ref[...] = jnp.full((8, 128), jnp.sum(focal), dtype=jnp.float32)


def _focal_none_kernel(logits_ref, targets_ref, out_ref, *, alpha, gamma):
    # Out-of-bounds rows of the trailing block are dropped by the writeback DMA.
    out_ref[...] = _per_row_focal(logits_ref, targets_ref,
                                  alpha=alpha, gamma=gamma)


def _tiling(N, C, itemsize):
    """Pick (tile_b, num_tiles, vmem_limit_bytes) from a lane-padded bytes budget."""
    row_mult = max(8, 32 // itemsize)            # 8 f32 / 16 bf16 / 32 int8
    lanes = _round_up(max(C, 1), 128)            # lane-padded class width
    vmem_cap = _vmem_capacity_bytes()

    # Per-row VMEM: double-buffered native-dtype logits tile, double-buffered
    # 128-lane-padded (TB, 1) int32 targets, ~4 full-tile f32 intermediates.
    per_row = 2 * lanes * itemsize + 2 * 128 * 4 + 4 * lanes * 4
    budget = vmem_cap // 4

    tile_b = max(row_mult, (budget // per_row) // row_mult * row_mult)
    if tile_b >= N:
        if N >= 2 * row_mult:
            # Ensure >= 2 tiles so "parallel" can split across v7x's two cores.
            tile_b = _round_up(-(-N // 2), row_mult)
        else:
            tile_b = N                           # single full-extent block
    num_tiles = pl.cdiv(N, tile_b)

    accounted = tile_b * per_row + 4 * 8 * 128 * 4 + (2 << 20)
    vmem_limit = int(min(int(0.75 * vmem_cap),
                         max(2 * accounted, 32 * 1024 * 1024)))
    vmem_limit = max(vmem_limit, accounted)
    return tile_b, num_tiles, vmem_limit


def focal_loss(logits, targets, *, alpha=1.0, gamma=2.0, reduction="mean"):
    """Focal loss via a Pallas TPU kernel.

    logits: (N, C) float array (f32/bf16); targets: (N,) int class indices.
    reduction: 'mean', 'sum' or 'none'.
    """
    assert reduction in ("mean", "sum", "none")
    N, C = logits.shape
    itemsize = jnp.dtype(logits.dtype).itemsize
    tile_b, num_tiles, vmem_limit = _tiling(N, C, itemsize)

    targets2d = targets.astype(jnp.int32).reshape(N, 1)   # free reshape, no pad

    in_specs = [
        pl.BlockSpec((tile_b, C), lambda i: (i, 0)),
        pl.BlockSpec((tile_b, 1), lambda i: (i, 0)),
    ]
    cparams = pltpu.CompilerParams(
        dimension_semantics=("parallel",),
        vmem_limit_bytes=vmem_limit,
    )

    if reduction == "none":
        kernel = functools.partial(_focal_none_kernel,
                                   alpha=float(alpha), gamma=float(gamma))
        out = pl.pallas_call(
            kernel,
            out_shape=jax.ShapeDtypeStruct((N, 1), jnp.float32),
            grid_spec=pltpu.PrefetchScalarGridSpec(
                num_scalar_prefetch=0,
                grid=(num_tiles,),
                in_specs=in_specs,
                out_specs=pl.BlockSpec((tile_b, 1), lambda i: (i, 0)),
            ),
            compiler_params=cparams,
        )(logits, targets2d)
        return out[:, 0]

    kernel = functools.partial(_focal_sum_kernel,
                               alpha=float(alpha), gamma=float(gamma),
                               n_valid=N, tile_b=tile_b)
    partials = pl.pallas_call(
        kernel,
        out_shape=jax.ShapeDtypeStruct((8 * num_tiles, 128), jnp.float32),
        grid_spec=pltpu.PrefetchScalarGridSpec(
            num_scalar_prefetch=0,
            grid=(num_tiles,),
            in_specs=in_specs,
            out_specs=pl.BlockSpec((8, 128), lambda i: (i, 0)),
        ),
        compiler_params=cparams,
    )(logits, targets2d)

    # Every element of a tile's (8, 128) block equals that tile's partial sum.
    total = jnp.sum(partials[::8, 0])
    if reduction == "mean":
        return total / jnp.float32(N)
    return total


def focal_loss_reference(logits, targets, *, alpha=1.0, gamma=2.0,
                         reduction="mean"):
    """Pure-JAX reference mirroring the PyTorch module."""
    logits = logits.astype(jnp.float32)
    logprobs = jax.nn.log_softmax(logits, axis=-1)
    ce = -jnp.take_along_axis(
        logprobs, targets[:, None].astype(jnp.int32), axis=-1)[:, 0]
    pt = jnp.exp(-ce)
    focal = alpha * (1.0 - pt) ** gamma * ce
    if reduction == "mean":
        return jnp.mean(focal)
    if reduction == "sum":
        return jnp.sum(focal)
    return focal


if __name__ == "__main__":
    key = jax.random.PRNGKey(0)
    k1, k2, k3, k4, k5, k6 = jax.random.split(key, 6)

    # Case 1: small f32, batch=16, 8 classes -> two 8-row tiles (v7x TC split).
    N, C = 16, 8
    logits = jax.random.normal(k1, (N, C), dtype=jnp.float32)
    targets = jax.random.randint(k2, (N,), 0, C, dtype=jnp.int32)
    out = jax.block_until_ready(focal_loss(logits, targets, alpha=1.0, gamma=2.0))
    ref = focal_loss_reference(logits, targets, alpha=1.0, gamma=2.0)
    assert jnp.allclose(out, ref, atol=1e-5, rtol=1e-5), (out, ref)

    # Case 2: non-tile-aligned batch (ragged trailing block, no host-side pad),
    # non-default alpha/gamma, mean and sum.
    N2, C2 = 40, 8
    logits2 = jax.random.normal(k3, (N2, C2), dtype=jnp.float32)
    targets2 = jax.random.randint(k4, (N2,), 0, C2, dtype=jnp.int32)
    out2m = jax.block_until_ready(
        focal_loss(logits2, targets2, alpha=0.25, gamma=1.5, reduction="mean"))
    ref2m = focal_loss_reference(logits2, targets2, alpha=0.25, gamma=1.5,
                                 reduction="mean")
    assert jnp.allclose(out2m, ref2m, atol=1e-5, rtol=1e-5), (out2m, ref2m)
    out2s = jax.block_until_ready(
        focal_loss(logits2, targets2, alpha=0.25, gamma=1.5, reduction="sum"))
    ref2s = focal_loss_reference(logits2, targets2, alpha=0.25, gamma=1.5,
                                 reduction="sum")
    assert jnp.allclose(out2s, ref2s, atol=1e-5, rtol=1e-5), (out2s, ref2s)

    # Case 3: bf16 logits (16-row sublane packing), ragged trailing block.
    N3, C3 = 48, 8
    logits3 = jax.random.normal(k5, (N3, C3), dtype=jnp.bfloat16)
    targets3 = jax.random.randint(k6, (N3,), 0, C3, dtype=jnp.int32)
    out3 = jax.block_until_ready(focal_loss(logits3, targets3))
    ref3 = focal_loss_reference(logits3, targets3)
    assert jnp.allclose(out3, ref3, atol=1e-5, rtol=1e-4), (out3, ref3)

    # Case 4: reduction='none' per-sample output.
    out4 = jax.block_until_ready(
        focal_loss(logits, targets, alpha=1.0, gamma=2.0, reduction="none"))
    ref4 = focal_loss_reference(logits, targets, alpha=1.0, gamma=2.0,
                                reduction="none")
    assert out4.shape == (N,)
    assert jnp.allclose(out4, ref4, atol=1e-5, rtol=1e-5), (out4, ref4)

    print("KERNEL_OK")
</pallas_src>

<mosaic_0001>
module attributes {stable_mosaic.version = 11 : i64} {
  func.func @_focal_sum_kernel(%arg0: i32, %arg1: memref<8x8xf32, #tpu.memory_space<vmem>>, %arg2: memref<8x1xi32, #tpu.memory_space<vmem>>, %arg3: memref<8x128xf32, #tpu.memory_space<vmem>>) attributes {dimension_semantics = [#tpu.dimension_semantics<parallel>], iteration_bounds = array<i64: 2>, scalar_prefetch = 0 : i64, scratch_operands = 0 : i64, tpu.core_type = #tpu.core_type<tc>, window_params = [{transform_indices = @transform_0, window_bounds = array<i64: 8, 8>}, {transform_indices = @transform_1, window_bounds = array<i64: 8, 1>}, {transform_indices = @transform_2, window_bounds = array<i64: 8, 128>}]} {
    %c0 = arith.constant 0 : index
    %c0_0 = arith.constant 0 : index
    %0 = vector.load %arg1[%c0, %c0_0] : memref<8x8xf32, #tpu.memory_space<vmem>>, vector<8x8xf32>
    %c0_1 = arith.constant 0 : index
    %c0_2 = arith.constant 0 : index
    %1 = vector.load %arg2[%c0_1, %c0_2] : memref<8x1xi32, #tpu.memory_space<vmem>>, vector<8x1xi32>
    %cst = arith.constant dense<0xFF800000> : vector<8xf32>
    %2 = vector.multi_reduction <maximumf>, %0, %cst [1] : vector<8x8xf32> to vector<8xf32>
    %3 = vector.shape_cast %2 : vector<8xf32> to vector<8x1xf32>
    %4 = vector.broadcast %3 : vector<8x1xf32> to vector<8x8xf32>
    %5 = arith.subf %0, %4 : vector<8x8xf32>
    %6 = math.exp %5 : vector<8x8xf32>
    %cst_3 = arith.constant dense<0.000000e+00> : vector<8xf32>
    %7 = vector.multi_reduction <add>, %6, %cst_3 [1] : vector<8x8xf32> to vector<8xf32>
    %8 = vector.shape_cast %7 : vector<8xf32> to vector<8x1xf32>
    %9 = math.log %8 : vector<8x1xf32>
    %10 = arith.addf %3, %9 : vector<8x1xf32>
    %11 = tpu.iota {dimensions = array<i32: 1>} : vector<8x8xi32>
    %12 = vector.broadcast %1 : vector<8x1xi32> to vector<8x8xi32>
    %13 = arith.cmpi eq, %11, %12 : vector<8x8xi32>
    %cst_4 = arith.constant 0.000000e+00 : f32
    %14 = vector.broadcast %cst_4 : f32 to vector<8x8xf32>
    %15 = arith.select %13, %0, %14 : vector<8x8xi1>, vector<8x8xf32>
    %cst_5 = arith.constant dense<0.000000e+00> : vector<8xf32>
    %16 = vector.multi_reduction <add>, %15, %cst_5 [1] : vector<8x8xf32> to vector<8xf32>
    %17 = vector.shape_cast %16 : vector<8xf32> to vector<8x1xf32>
    %18 = arith.subf %10, %17 : vector<8x1xf32>
    %cst_6 = arith.constant 0.000000e+00 : f32
    %19 = vector.broadcast %cst_6 : f32 to vector<8x1xf32>
    %20 = arith.subf %19, %18 : vector<8x1xf32>
    %21 = math.exp %20 : vector<8x1xf32>
    %cst_7 = arith.constant 1.000000e+00 : f32
    %22 = vector.broadcast %cst_7 : f32 to vector<8x1xf32>
    %23 = arith.subf %22, %21 : vector<8x1xf32>
    %cst_8 = arith.constant 0.000000e+00 : f32
    %24 = vector.broadcast %cst_8 : f32 to vector<8x1xf32>
    %25 = arith.maximumf %23, %24 : vector<8x1xf32>
    %26 = arith.mulf %25, %25 : vector<8x1xf32>
    %cst_9 = arith.constant 1.000000e+00 : f32
    %27 = vector.broadcast %cst_9 : f32 to vector<8x1xf32>
    %28 = arith.mulf %27, %26 : vector<8x1xf32>
    %29 = arith.mulf %28, %18 : vector<8x1xf32>
    %c8_i32 = arith.constant 8 : i32
    %30 = arith.muli %arg0, %c8_i32 : i32
    %31 = tpu.iota {dimensions = array<i32: 0>} : vector<8x1xi32>
    %32 = vector.broadcast %30 : i32 to vector<8x1xi32>
    %33 = arith.addi %32, %31 : vector<8x1xi32>
    %c16_i32 = arith.constant 16 : i32
    %34 = vector.broadcast %c16_i32 : i32 to vector<8x1xi32>
    %35 = arith.cmpi slt, %33, %34 : vector<8x1xi32>
    %cst_10 = arith.constant 0.000000e+00 : f32
    %36 = vector.broadcast %cst_10 : f32 to vector<8x1xf32>
    %37 = arith.select %35, %29, %36 : vector<8x1xi1>, vector<8x1xf32>
    %38 = vector.shape_cast %37 : vector<8x1xf32> to vector<1x8x1xf32>
    %cst_11 = arith.constant dense<0.000000e+00> : vector<1xf32>
    %39 = vector.multi_reduction <add>, %38, %cst_11 [1, 2] : vector<1x8x1xf32> to vector<1xf32>
    %40 = vector.shape_cast %39 : vector<1xf32> to vector<1x1x1xf32>
    %41 = vector.extract %40[0, 0, 0] : f32 from vector<1x1x1xf32>
    %42 = vector.broadcast %41 : f32 to vector<8x128xf32>
    %c0_12 = arith.constant 0 : index
    %c0_13 = arith.constant 0 : index
    %43 = vector.load %arg3[%c0_12, %c0_13] : memref<8x128xf32, #tpu.memory_space<vmem>>, vector<8x128xf32>
    tpu.vector_store %arg3[%c0_12, %c0_13], %42 {strides = array<i32>} : memref<8x128xf32, #tpu.memory_space<vmem>>, vector<8x128xf32>,
    return
  }
  func.func @transform_0(%arg0: i32) -> (i32, i32) {
    %c0_i32 = arith.constant 0 : i32
    %c0_i32_0 = arith.constant 0 : i32
    return %arg0, %c0_i32 : i32, i32
  }
  func.func @transform_1(%arg0: i32) -> (i32, i32) {
    %c0_i32 = arith.constant 0 : i32
    %c0_i32_0 = arith.constant 0 : i32
    return %arg0, %c0_i32 : i32, i32
  }
  func.func @transform_2(%arg0: i32) -> (i32, i32) {
    %c0_i32 = arith.constant 0 : i32
    %c0_i32_0 = arith.constant 0 : i32
    return %arg0, %c0_i32 : i32, i32
  }
}

</mosaic_0001>

<llo_original>
// kernel: tpu_custom_call.1
$region0: #{tpu_custom_call.1}
  #allocation0 [shape = 'u32[]', space=smem, size = 0x4, offset = 0x4, fixed_abs, tag = 'smem constant byte address 0x4 - core index']
  #allocation1 [shape = 'u32[144,128]{1,0:T(1,128)}', space=vmem, size = 0x12000, scoped, tag = 'internal scratch']
  %s0 = inlined_call_operand.vmem [shape: f32[16,8], index: 0, kind: input, shape index: {}]
  %s1 = inlined_call_operand.vmem [shape: s32[16,1], index: 1, kind: input, shape index: {}]
  %s2 = inlined_call_operand.hbm [shape: f32[16,128], index: 2, kind: output, shape index: {}]
  %s3 = sld [smem:[#allocation0]]
  $region41: #{tpu_custom_call.1} parent=0
    _
  %s5 = ssub.s32 1, %s3
  %s6 = scalar_select 0, %s5, %s3
  $region1: #{tpu_custom_call.1} parent=0
    #allocation2 [shape = 'u8[8192]{0}', space=vmem, size = 0x2000, scoped, tag = 'output window, operand 0']
    #allocation3 [shape = 's32[2]{0}', space=sflag, size = 0x8, scoped, tag = 'scoped memory for tpu_custom_call.1']
    %7 = vsyncpa [#allocation3], 0
    %s8 = scalar_lea.sflag [#allocation3], 1
    %9 = vsyncpa %s8, 0
    loop: start=0, step=1, limit=4
    $region2: #{tpu_custom_call.1} parent=1 // loop_pre_header
      _
    $region3: #{tpu_custom_call.1} parent=1 // loop_header
      %s11 = sphi 0, %s15
      %p12 = scmp.ge.s32.totalorder %s11, 4
      %s21 = sphi 0, %s23
      %s24 = sphi 0, %s21
      %s25 = sphi 0, %s24
      %s41 = sphi 0, %s25
      %s47 = sphi 0, %s49
      %s50 = sphi 0, %s47
      %s51 = sphi 0, %s50
      %s67 = sphi 0, %s51
      %s73 = sphi 0, %s75
      %s76 = sphi 0, %s73
      %s77 = sphi 0, %s76
      %s93 = sphi 0, %s77
    $region4: #{tpu_custom_call.1} parent=1 // loop_header_branch
      %14 = sbr.rel (%p12) target = $region8
    $region5: #{tpu_custom_call.1} parent=1 // loop_body
      %s16 = ssub.s32 %s11, 1
      %s17 = ssub.s32 %s11, 2
      %s18 = sadd.s32 %s11, 1
      %s19 = ssub.s32 %s11, %s18
      %p20 = scmp.eq.s32.totalorder %s19, 0
      %s22 = sadd.s32 %s21, 1
      %s23 = scalar_select %p20, %s21, %s22
      %p26 = pneg %p20
      %p27 = scmp.eq.s32.totalorder %s11, 1
      %p28 = por %p26, %p27
      %p29 = scmp.ne.s32.totalorder %s21, %s24
      %p30 = scmp.eq.s32.totalorder %s11, 0
      %p31 = por %p29, %p30
      %p32 = scmp.ne.s32.totalorder %s21, %s24
      %p33 = scmp.eq.s32.totalorder %s16, 1
      %p34 = por %p32, %p33
      %p35 = scmp.ne.s32.totalorder %s24, %s25
      %p36 = scmp.eq.s32.totalorder %s16, 0
      %p37 = por %p35, %p36
      %p38 = scmp.ne.s32.totalorder %s24, %s25
      %p39 = scmp.eq.s32.totalorder %s17, 1
      %p40 = por %p38, %p39
      %p42 = scmp.ne.s32.totalorder %s25, %s41
      %p43 = scmp.eq.s32.totalorder %s17, 0
      %p44 = por %p42, %p43
      %s45 = ssub.s32 %s11, %s18
      %p46 = scmp.eq.s32.totalorder %s45, 0
      %s48 = sadd.s32 %s47, 1
      %s49 = scalar_select %p46, %s47, %s48
      %p52 = pneg %p46
      %p53 = scmp.eq.s32.totalorder %s11, 1
      %p54 = por %p52, %p53
      %p55 = scmp.ne.s32.totalorder %s47, %s50
      %p56 = scmp.eq.s32.totalorder %s11, 0
      %p57 = por %p55, %p56
      %p58 = scmp.ne.s32.totalorder %s47, %s50
      %p59 = scmp.eq.s32.totalorder %s16, 1
      %p60 = por %p58, %p59
      %p61 = scmp.ne.s32.totalorder %s50, %s51
      %p62 = scmp.eq.s32.totalorder %s16, 0
      %p63 = por %p61, %p62
      %p64 = scmp.ne.s32.totalorder %s50, %s51
      %p65 = scmp.eq.s32.totalorder %s17, 1
      %p66 = por %p64, %p65
      %p68 = scmp.ne.s32.totalorder %s51, %s67
      %p69 = scmp.eq.s32.totalorder %s17, 0
      %p70 = por %p68, %p69
      %s71 = ssub.s32 %s11, %s18
      %p72 = scmp.eq.s32.totalorder %s71, 0
      %s74 = sadd.s32 %s73, 1
      %s75 = scalar_select %p72, %s73, %s74
      %p78 = pneg %p72
      %p79 = scmp.eq.s32.totalorder %s11, 1
      %p80 = por %p78, %p79
      %p81 = scmp.ne.s32.totalorder %s73, %s76
      %p82 = scmp.eq.s32.totalorder %s11, 0
      %p83 = por %p81, %p82
      %p84 = scmp.ne.s32.totalorder %s73, %s76
      %p85 = scmp.eq.s32.totalorder %s16, 1
      %p86 = por %p84, %p85
      %p87 = scmp.ne.s32.totalorder %s76, %s77
      %p88 = scmp.eq.s32.totalorder %s16, 0
      %p89 = por %p87, %p88
      %p90 = scmp.ne.s32.totalorder %s76, %s77
      %p91 = scmp.eq.s32.totalorder %s17, 1
      %p92 = por %p90, %p91
      %p94 = scmp.ne.s32.totalorder %s77, %s93
      %p95 = scmp.eq.s32.totalorder %s17, 0
      %p96 = por %p94, %p95
      %p97 = scmp.le.s32.totalorder 1, %s11
      %p98 = scmp.lt.s32.totalorder %s11, 3
      %p99 = pnand %p97, %p98
      %p100 = pneg %p99
      // Predicated region
      $region9: #{tpu_custom_call.1} parent=5 // pred_check
        _
      $region10: #{tpu_custom_call.1} parent=5 // pred_check_branch
        %102 = sbr.rel (%p99) target = $region12
      $region11: #{tpu_custom_call.1} parent=5 // pred_region
        %s103 = ssub.s32 %s11, 1
      $region12: #{tpu_custom_call.1} parent=5 // pred_fallthru
        _
      %p104 = scmp.lt.s32.totalorder %s11, 2
      // Predicated region
      $region13: #{tpu_custom_call.1} parent=5 // pred_check
        %p105 = pneg %p104
      $region14: #{tpu_custom_call.1} parent=5 // pred_check_branch
        %107 = sbr.rel (%p105) target = $region16
      $region15: #{tpu_custom_call.1} parent=5 // pred_region
        // Predicated region
        $region17: #{tpu_custom_call.1} parent=15 // pred_check
          %p108 = pneg %p31
        $region18: #{tpu_custom_call.1} parent=15 // pred_check_branch
          %110 = sbr.rel (%p108) target = $region20
        $region19: #{tpu_custom_call.1} parent=15 // pred_region
          %p111 = scmp.lt.s32.totalorder %s11, 1
          %s112 = scalar_select %p111, %s11, 1
          %s113 = smul.addr %s112, 8
          %s114 = scalar_lea.vmem %s0, %s113
        $region20: #{tpu_custom_call.1} parent=15 // pred_fallthru
          _
        // Predicated region
        $region21: #{tpu_custom_call.1} parent=15 // pred_check
          %p115 = pneg %p57
        $region22: #{tpu_custom_call.1} parent=15 // pred_check_branch
          %117 = sbr.rel (%p115) target = $region24
        $region23: #{tpu_custom_call.1} parent=15 // pred_region
          %p118 = scmp.lt.s32.totalorder %s11, 1
          %s119 = scalar_select %p118, %s11, 1
          %s120 = smul.addr %s119, 8
          %s121 = scalar_lea.vmem %s1, %s120
        $region24: #{tpu_custom_call.1} parent=15 // pred_fallthru
          _
      $region16: #{tpu_custom_call.1} parent=5 // pred_fallthru
        _
      %p122 = scmp.le.s32.totalorder 1, %s11
      %p123 = scmp.lt.s32.totalorder %s11, 3
      %p124 = pnand %p122, %p123
      %p125 = pneg %p124
      // Predicated region
      $region25: #{tpu_custom_call.1} parent=5 // pred_check
        _
      $region26: #{tpu_custom_call.1} parent=5 // pred_check_branch
        %127 = sbr.rel (%p124) target = $region28
      $region27: #{tpu_custom_call.1} parent=5 // pred_region
        %s128 = ssub.s32 %s11, 1
        %p129 = scmp.lt.s32.totalorder %s16, 1
        %s130 = scalar_select %p129, %s16, 1
        %s131 = smul.addr %s130, 8
        %s132 = scalar_lea.vmem %s0, %s131
        %p133 = pneg %p37
        %p134 = pneg %p34
        %p135 = scmp.lt.s32.totalorder %s16, 1
        %s136 = scalar_select %p135, %s16, 1
        %s137 = smul.addr %s136, 8
        %s138 = scalar_lea.vmem %s1, %s137
        %p139 = pneg %p63
        %p140 = pneg %p60
        %p141 = pneg %p89
        %p142 = pneg %p86
        %s143 = sand.u32 %s76, 1
        %s144 = scalar_lea.sflag [#allocation3], %s143
        %s145 = sand.u32 %s76, 1
        %s146 = smul.addr %s145, 8
        %s147 = scalar_lea.vmem [#allocation2], %s146
        %p148 = scmp.lt.s32.totalorder %s16, 1
        %s149 = scalar_select %p148, %s16, 1
        %s150 = smul.addr %s149, 8
        %s151 = scalar_lea.vmem %s0, %s150
        %p152 = scmp.lt.s32.totalorder %s16, 1
        %s153 = scalar_select %p152, %s16, 1
        %s154 = smul.addr %s153, 8
        %s155 = scalar_lea.vmem %s1, %s154
        %v156 = vld [vmem:[%s151] sm:$0xff]
        %v157 = vld [vmem:[%s155] sm:$0xff]
        %vm158 = vcmask 64512
        %v159 = vsel %vm158, %v156, -inf
        %160 = vmax.xlane.f32.xlu0 %v159
        %v161 = vpop.xlane.xlu0 %160
        %v162 = vsub.f32 %v156, %v161
        %v163 = vmul.f32 %v162, 1.442695
        %v164 = vpow.pop %v163
        %v165 = vsel %vm158, %v164, 0.0
        %166 = vadd.xlane.f32.xlu0 %v165
        %v167 = vpop.xlane.xlu0 %166
        %v168 = vlog2.pop %v167
        %v169 = vmul.f32 %v168, 0.6931472
        %v170 = vadd.f32 %v161, %v169
        %v171 = vlaneseq
        %v172 = vand.u32 %v171, 127
        %173 = vset.pattern.permute.xlu0 0
        %174 = vperm.xlu0 %173, %v157
        %v175 = vpop.permute.xlu0 %174
        %vm176 = vcmp.eq.s32.totalorder %v172, %v175
        %v177 = vsel %vm176, %v156, 0.0
        %v178 = vsel %vm158, %v177, 0.0
        %179 = vadd.xlane.f32.xlu0 %v178
        %v180 = vpop.xlane.xlu0 %179
        %v181 = vsub.f32 %v170, %v180
        %v182 = vsub.f32 0.0, %v181
        %v183 = vmul.f32 %v182, 1.442695
        %v184 = vpow.pop %v183
        %v185 = vsub.f32 1.0, %v184
        %v186 = vmax.f32 %v185, 0.0
        %v187 = vmul.f32 %v186, %v186
        %v188 = vmul.f32 %v187, %v181
        %s189 = smul.u32 %s16, 8
        %v190 = vlaneseq
        %v191 = vshrl.u32 %v190, 7
        %v192 = vstv %s189
        %v193 = vadd.s32 %v192, %v191
        %vm194 = vcmp.lt.s32.totalorder %v193, 16
        %v195 = vsel %vm194, %v188, 0.0
        %vm196 = vcmask 7168
        %v197 = vsel %vm196, %v195, 0.0
        %198 = vadd.xlane.f32.xlu0 %v197
        %v199 = vpop.xlane.xlu0 %198
        %v200 = vrot.slane %v199, 4
        %v201 = vadd.f32 %v199, %v200
        %v202 = vrot.slane %v201, 2
        %v203 = vadd.f32 %v201, %v202
        %v204 = vrot.slane %v203, 1
        %v205 = vadd.f32 %v203, %v204
        %s206 = vtos %v205
        %v207 = vstv %s206
        %208 = vst [vmem:[%s147] sm:$0xff] %v207
        %s209 = sand.u32 %s76, 1
        %s210 = scalar_lea.sflag [#allocation3], %s209
        %s211 = sand.u32 %s76, 1
        %s212 = smul.addr %s211, 8
        %s213 = scalar_lea.vmem [#allocation2], %s212
        // Predicated region
        $region29: #{tpu_custom_call.1} parent=27 // pred_check
          %p214 = pneg %p86
        $region30: #{tpu_custom_call.1} parent=27 // pred_check_branch
          %216 = sbr.rel (%p214) target = $region32
        $region31: #{tpu_custom_call.1} parent=27 // pred_region
          %s218 = ssub.s32 128, 128
          %219 = vsyncadd %s210, %s218
          %s220 = smul.addr %s16, 128
          %s221 = scalar_lea.hbm %s2, %s220
          %s223 = sshll.u32 %s213, 4
          %s224 = int_to_ptr.vmem [resolvable:$true] %s223
          %226 = dma.vmem_to_hbm [thread:$0]  %s224, 128, %s221, %s210
        $region32: #{tpu_custom_call.1} parent=27 // pred_fallthru
          _
      $region28: #{tpu_custom_call.1} parent=5 // pred_fallthru
        _
      %p227 = scmp.le.s32.totalorder 2, %s11
      // Predicated region
      $region33: #{tpu_custom_call.1} parent=5 // pred_check
        %p228 = pneg %p227
      $region34: #{tpu_custom_call.1} parent=5 // pred_check_branch
        %230 = sbr.rel (%p228) target = $region36
      $region35: #{tpu_custom_call.1} parent=5 // pred_region
        %s231 = ssub.s32 %s11, 2
        // Predicated region
        $region37: #{tpu_custom_call.1} parent=35 // pred_check
          %p232 = pneg %p92
        $region38: #{tpu_custom_call.1} parent=35 // pred_check_branch
          %234 = sbr.rel (%p232) target = $region40
        $region39: #{tpu_custom_call.1} parent=35 // pred_region
          %s235 = sand.u32 %s77, 1
          %s236 = scalar_lea.sflag [#allocation3], %s235
          %s237 = sand.u32 %s77, 1
          %s238 = smul.addr %s237, 8
          %s239 = scalar_lea.vmem [#allocation2], %s238
          %240 = dma.done %s236, 128
        $region40: #{tpu_custom_call.1} parent=35 // pred_fallthru
          _
      $region36: #{tpu_custom_call.1} parent=5 // pred_fallthru
        _
    $region6: #{tpu_custom_call.1} parent=1 // loop_footer
      %s15 = sadd.s32 1, %s11
    $region7: #{tpu_custom_call.1} parent=1 // loop_footer_branch
      %10 = sbr.rel target = $region3
    $region8: #{tpu_custom_call.1} parent=1 // loop_exit
      _
    %241 = vsyncpa [#allocation3], 1
    %s242 = scalar_lea.sflag [#allocation3], 1
    %243 = vsyncpa %s242, 1

</llo_original>
